<compile_context>
chip_gen: v7x
topology: tpu7x:2x2x1
jax: 0.10.0
libtpu: 0.0.40
codegen_flags: <defaults>
</compile_context>

<pallas_src>
import functools
import math

import jax
import jax.numpy as jnp
from jax.experimental import pallas as pl
from jax.experimental.pallas import tpu as pltpu

F32 = jnp.float32


# ----------------------------- hardware budget ------------------------------

def _vmem_budget_bytes():
    try:
        return int(pltpu.get_tpu_info().vmem_capacity_bytes)
    except Exception:
        return 64 * 1024 * 1024          # conservative (v7x-sized) fallback


_VMEM_BYTES = _vmem_budget_bytes()
_VMEM_LIMIT = int(min(_VMEM_BYTES, 128 * 1024 * 1024) * 3 // 4)

# generation-aware tile preferences (bf16 tiles, f32 accumulators)
if _VMEM_BYTES >= 96 * 1024 * 1024:      # v5e / v6e: 128 MiB VMEM
    _TM, _TN, _TK = 1024, 512, 1024
    _TM_LN = 1024
else:                                    # v7x: 64 MiB VMEM (48 MiB budget)
    _TM, _TN, _TK = 512, 512, 1024
    _TM_LN = 512


def _cparams(dims):
    return pltpu.CompilerParams(dimension_semantics=dims,
                                vmem_limit_bytes=_VMEM_LIMIT)


def _round_up(x, m):
    return ((x + m - 1) // m) * m


def _pick_tile(dim, pref, align):
    """Largest tile <= pref that divides dim and is `align`-aligned, else dim."""
    if dim <= pref:
        return dim
    t = (pref // align) * align
    while t >= align:
        if dim % t == 0:
            return t
        t -= align
    return dim


def _pad_rows(x, mp):
    m = x.shape[0]
    if mp == m:
        return x
    return jnp.pad(x, ((0, mp - m), (0, 0)))


# ----------------------------- Pallas kernels -------------------------------

def _linear_kernel(x_ref, w_ref, b_ref, o_ref, acc_ref, *, activation):
    """Tiled o = act(x @ w + b); accumulate over the K grid axis."""
    k = pl.program_id(2)

    @pl.when(k == 0)
    def _():
        acc_ref[...] = jnp.zeros_like(acc_ref)

    acc_ref[...] += jnp.dot(x_ref[...], w_ref[...],
                            preferred_element_type=jnp.float32)

    @pl.when(k == pl.num_programs(2) - 1)
    def _():
        y = acc_ref[...] + b_ref[...].astype(jnp.float32)
        if activation == "gelu":
            # TODO(synk): HF BERT uses erf-based GELU; tanh approximation kept
            # for guaranteed Mosaic lowering (tiny numeric delta).
            c = math.sqrt(2.0 / math.pi)
            y = 0.5 * y * (1.0 + jnp.tanh(c * (y + 0.044715 * y * y * y)))
        elif activation == "tanh":
            y = jnp.tanh(y)
        o_ref[...] = y.astype(o_ref.dtype)


def linear(x, w, b, activation=None, out_dtype=None):
    M, K = x.shape
    _, N = w.shape
    out_dtype = out_dtype or x.dtype
    tm = min(_TM, _round_up(M, 16))
    Mp = _round_up(M, tm)
    tn = _pick_tile(N, _TN, 128)
    tk = _pick_tile(K, _TK, 128)
    out = pl.pallas_call(
        functools.partial(_linear_kernel, activation=activation),
        out_shape=jax.ShapeDtypeStruct((Mp, N), out_dtype),
        grid=(Mp // tm, N // tn, K // tk),
        in_specs=[
            pl.BlockSpec((tm, tk), lambda i, j, k: (i, k)),
            pl.BlockSpec((tk, tn), lambda i, j, k: (k, j)),
            pl.BlockSpec((1, tn), lambda i, j, k: (0, j)),
        ],
        out_specs=pl.BlockSpec((tm, tn), lambda i, j, k: (i, j)),
        scratch_shapes=[pltpu.VMEM((tm, tn), jnp.float32)],
        compiler_params=_cparams(("parallel", "parallel", "arbitrary")),
    )(_pad_rows(x, Mp), w, b.reshape(1, N))
    return out if Mp == M else out[:M]


def _linear_res_ln_kernel(x_ref, w_ref, b_ref, r_ref, g_ref, bb_ref,
                          o_ref, acc_ref, *, eps):
    """o = LayerNorm(x @ w + b + residual) * g + bb, fused in the K epilogue."""
    k = pl.program_id(1)

    @pl.when(k == 0)
    def _():
        acc_ref[...] = jnp.zeros_like(acc_ref)

    acc_ref[...] += jnp.dot(x_ref[...], w_ref[...],
                            preferred_element_type=jnp.float32)

    @pl.when(k == pl.num_programs(1) - 1)
    def _():
        y = (acc_ref[...] + b_ref[...].astype(jnp.float32)
             + r_ref[...].astype(jnp.float32))
        mean = jnp.mean(y, axis=-1, keepdims=True)
        var = jnp.mean((y - mean) * (y - mean), axis=-1, keepdims=True)
        yn = (y - mean) * jax.lax.rsqrt(var + eps)
        o_ref[...] = (yn * g_ref[...] + bb_ref[...]).astype(o_ref.dtype)


def linear_residual_layernorm(x, w, b, residual, gamma, beta,
                              eps=1e-12, out_dtype=None):
    M, K = x.shape
    _, N = w.shape
    out_dtype = out_dtype or residual.dtype
    tm = min(_TM_LN, _round_up(M, 16))
    Mp = _round_up(M, tm)
    tk = _pick_tile(K, _TK, 128)
    out = pl.pallas_call(
        functools.partial(_linear_res_ln_kernel, eps=eps),
        out_shape=jax.ShapeDtypeStruct((Mp, N), out_dtype),
        grid=(Mp // tm, K // tk),
        in_specs=[
            pl.BlockSpec((tm, tk), lambda i, k: (i, k)),
            pl.BlockSpec((tk, N), lambda i, k: (k, 0)),
            pl.BlockSpec((1, N), lambda i, k: (0, 0)),
            pl.BlockSpec((tm, N), lambda i, k: (i, 0)),
            pl.BlockSpec((1, N), lambda i, k: (0, 0)),
            pl.BlockSpec((1, N), lambda i, k: (0, 0)),
        ],
        out_specs=pl.BlockSpec((tm, N), lambda i, k: (i, 0)),
        scratch_shapes=[pltpu.VMEM((tm, N), jnp.float32)],
        compiler_params=_cparams(("parallel", "arbitrary")),
    )(_pad_rows(x, Mp), w, b.reshape(1, N), _pad_rows(residual, Mp),
      gamma.reshape(1, N), beta.reshape(1, N))
    return out if Mp == M else out[:M]


def _layernorm_kernel(x_ref, g_ref, b_ref, o_ref, *, eps):
    x = x_ref[...].astype(jnp.float32)
    mean = jnp.mean(x, axis=-1, keepdims=True)
    var = jnp.mean((x - mean) * (x - mean), axis=-1, keepdims=True)
    xn = (x - mean) * jax.lax.rsqrt(var + eps)
    o_ref[...] = (xn * g_ref[...] + b_ref[...]).astype(o_ref.dtype)


def layernorm(x, gamma, beta, eps=1e-12, out_dtype=None):
    M, H = x.shape
    out_dtype = out_dtype or x.dtype
    tm = min(_TM_LN, _round_up(M, 16))
    Mp = _round_up(M, tm)
    out = pl.pallas_call(
        functools.partial(_layernorm_kernel, eps=eps),
        out_shape=jax.ShapeDtypeStruct((Mp, H), out_dtype),
        grid=(Mp // tm,),
        in_specs=[
            pl.BlockSpec((tm, H), lambda i: (i, 0)),
            pl.BlockSpec((1, H), lambda i: (0, 0)),
            pl.BlockSpec((1, H), lambda i: (0, 0)),
        ],
        out_specs=pl.BlockSpec((tm, H), lambda i: (i, 0)),
        compiler_params=_cparams(("parallel",)),
    )(_pad_rows(x, Mp), gamma.reshape(1, H), beta.reshape(1, H))
    return out if Mp == M else out[:M]


def _flash_kernel(q_ref, k_ref, v_ref, msk_ref, o_ref, m_sc, l_sc, acc_sc, *,
                  d, hp, qo, ko, vo, scale):
    """Online-softmax attention over a KV-block grid axis (never [S, S]).

    Each grid step handles `hp` packed heads from lane-dense column blocks.
    """
    ki = pl.program_id(2)

    @pl.when(ki == 0)
    def _():
        m_sc[...] = jnp.full_like(m_sc, -1e30)
        l_sc[...] = jnp.zeros_like(l_sc)
        acc_sc[...] = jnp.zeros_like(acc_sc)

    mask = msk_ref[...]                                   # [1, tkv] additive
    for hh in range(hp):                                  # unrolled packed heads
        q = q_ref[:, qo + hh * d: qo + (hh + 1) * d]
        k = k_ref[:, ko + hh * d: ko + (hh + 1) * d]
        v = v_ref[:, vo + hh * d: vo + (hh + 1) * d]
        s = jax.lax.dot_general(q, k, (((1,), (1,)), ((), ())),
                                preferred_element_type=jnp.float32)
        s = s * scale + mask
        m_prev = m_sc[hh]                                 # [tq, 1]
        m_new = jnp.maximum(m_prev, jnp.max(s, axis=-1, keepdims=True))
        alpha = jnp.exp(m_prev - m_new)
        p = jnp.exp(s - m_new)
        l_sc[hh] = alpha * l_sc[hh] + jnp.sum(p, axis=-1, keepdims=True)
        acc_sc[:, hh * d:(hh + 1) * d] = (
            alpha * acc_sc[:, hh * d:(hh + 1) * d]
            + jnp.dot(p.astype(v.dtype), v, preferred_element_type=jnp.float32))
        m_sc[hh] = m_new

    @pl.when(ki == pl.num_programs(2) - 1)
    def _():
        for hh in range(hp):
            inv = pl.reciprocal(l_sc[hh], approx=True)
            o_ref[:, hh * d:(hh + 1) * d] = (
                acc_sc[:, hh * d:(hh + 1) * d] * inv).astype(o_ref.dtype)


def flash_attention(qkv, add_mask, B, S, n_heads, head_dim, hidden, scale,
                    out_dtype):
    """qkv: [B*S, 3*hidden] (Q | K | V column regions, head-major inside each).

    Reads lane-dense column blocks directly from the fused QKV buffer and
    writes ctx as [B*S, hidden] -- no XLA transposes around attention.
    """
    nh, d = n_heads, head_dim
    if d % 128 == 0:
        hp, fast = 1, True                     # head already lane-dense
    elif 128 % d == 0 and nh % (128 // d) == 0:
        hp, fast = 128 // d, True              # pack heads to 128 lanes
    else:
        hp, fast = nh, False                   # compact fallback: full-row blocks
    ng = nh // hp
    tq = _pick_tile(S, 512, 16)
    tkv = _pick_tile(S, 512, 128)
    nq, nkv = S // tq, S // tkv
    width = hp * d

    if fast:
        grid = (B * ng, nq, nkv)               # batch x head-group folded (v7x)

        def q_idx(bp, qi, ki):
            return ((bp // ng) * nq + qi, bp % ng)

        def k_idx(bp, qi, ki):
            return ((bp // ng) * nkv + ki, ng + bp % ng)

        def v_idx(bp, qi, ki):
            return ((bp // ng) * nkv + ki, 2 * ng + bp % ng)

        def m_idx(bp, qi, ki):
            return (bp // ng, 0, ki)

        def o_idx(bp, qi, ki):
            return ((bp // ng) * nq + qi, bp % ng)

        in_specs = [pl.BlockSpec((tq, width), q_idx),
                    pl.BlockSpec((tkv, width), k_idx),
                    pl.BlockSpec((tkv, width), v_idx),
                    pl.BlockSpec((None, 1, tkv), m_idx)]
        out_specs = pl.BlockSpec((tq, width), o_idx)
        qo = ko = vo = 0
    else:
        # TODO(synk): head_dim not packable to 128 lanes -> full-row blocks
        # (only reasonable for small hidden sizes).
        grid = (B, nq, nkv)
        w3 = 3 * hidden

        def q_idx(b, qi, ki):
            return (b * nq + qi, 0)

        def kv_idx(b, qi, ki):
            return (b * nkv + ki, 0)

        def m_idx(b, qi, ki):
            return (b, 0, ki)

        def o_idx(b, qi, ki):
            return (b * nq + qi, 0)

        in_specs = [pl.BlockSpec((tq, w3), q_idx),
                    pl.BlockSpec((tkv, w3), kv_idx),
                    pl.BlockSpec((tkv, w3), kv_idx),
                    pl.BlockSpec((None, 1, tkv), m_idx)]
        out_specs = pl.BlockSpec((tq, hidden), o_idx)
        qo, ko, vo = 0, hidden, 2 * hidden

    return pl.pallas_call(
        functools.partial(_flash_kernel, d=d, hp=hp, qo=qo, ko=ko, vo=vo,
                          scale=scale),
        out_shape=jax.ShapeDtypeStruct((B * S, hidden), out_dtype),
        grid=grid,
        in_specs=in_specs,
        out_specs=out_specs,
        scratch_shapes=[pltpu.VMEM((hp, tq, 1), jnp.float32),
                        pltpu.VMEM((hp, tq, 1), jnp.float32),
                        pltpu.VMEM((tq, hp * d), jnp.float32)],
        compiler_params=_cparams(("parallel", "parallel", "arbitrary")),
    )(qkv, qkv, qkv, add_mask)


def _matmul_nt_colbias_kernel(a_ref, b_ref, c_ref, o_ref, acc_ref):
    """o = a @ b^T + bias_col, K-axis accumulation (weight-sized operands)."""
    k = pl.program_id(2)

    @pl.when(k == 0)
    def _():
        acc_ref[...] = jnp.zeros_like(acc_ref)

    acc_ref[...] += jax.lax.dot_general(
        a_ref[...], b_ref[...], (((1,), (1,)), ((), ())),
        preferred_element_type=jnp.float32)

    @pl.when(k == pl.num_programs(2) - 1)
    def _():
        o_ref[...] = (acc_ref[...] + c_ref[...].astype(jnp.float32)
                      ).astype(o_ref.dtype)


def matmul_nt_colbias(a, b, bias_col, out_dtype=None):
    """o[M,N] = a[M,K] @ b[N,K]^T + bias_col[M][:, None], tiled and gridded."""
    M, K = a.shape
    N, _ = b.shape
    out_dtype = out_dtype or a.dtype
    tm = _pick_tile(M, _TM, 16)
    tn = _pick_tile(N, _TN, 128)
    tk = _pick_tile(K, _TK, 128)
    return pl.pallas_call(
        _matmul_nt_colbias_kernel,
        out_shape=jax.ShapeDtypeStruct((M, N), out_dtype),
        grid=(M // tm, N // tn, K // tk),
        in_specs=[
            pl.BlockSpec((tm, tk), lambda i, j, k: (i, k)),
            pl.BlockSpec((tn, tk), lambda i, j, k: (j, k)),
            pl.BlockSpec((tm, 1), lambda i, j, k: (i, 0)),
        ],
        out_specs=pl.BlockSpec((tm, tn), lambda i, j, k: (i, j)),
        scratch_shapes=[pltpu.VMEM((tm, tn), jnp.float32)],
        compiler_params=_cparams(("parallel", "parallel", "arbitrary")),
    )(a, b, bias_col.reshape(M, 1))


def _bce_kernel(z_ref, y_ref, o_ref, *, rows_total, inv_denom, tm):
    """Mean-reduced BCEWithLogitsLoss, row-gridded with a (1,1) accumulator."""
    i = pl.program_id(0)

    @pl.when(i == 0)
    def _():
        o_ref[...] = jnp.zeros_like(o_ref)

    z = z_ref[...].astype(jnp.float32)
    y = y_ref[...].astype(jnp.float32)
    per = jnp.maximum(z, 0.0) - z * y + jnp.log1p(jnp.exp(-jnp.abs(z)))
    row = jax.lax.broadcasted_iota(jnp.int32, per.shape, 0) + i * tm
    per = jnp.where(row < rows_total, per, 0.0)        # mask padded rows
    o_ref[...] += jnp.sum(per) * inv_denom


def bce_with_logits(logits, labels):
    M, L = logits.shape
    tm = min(256, _round_up(M, 8))
    Mp = _round_up(M, tm)
    out = pl.pallas_call(
        functools.partial(_bce_kernel, rows_total=M,
                          inv_denom=1.0 / float(M * L), tm=tm),
        out_shape=jax.ShapeDtypeStruct((1, 1), jnp.float32),
        grid=(Mp // tm,),
        in_specs=[pl.BlockSpec((tm, L), lambda i: (i, 0)),
                  pl.BlockSpec((tm, L), lambda i: (i, 0))],
        out_specs=pl.BlockSpec((1, 1), lambda i: (0, 0)),
        compiler_params=_cparams(("arbitrary",)),
    )(_pad_rows(logits, Mp), _pad_rows(labels, Mp))
    return out[0, 0]


# --------------------------- model (glue in JAX) -----------------------------

def bert_encoder(params, input_ids, token_type_ids, attention_mask, cfg):
    B, S = input_ids.shape
    H, nh, d = cfg["hidden"], cfg["heads"], cfg["head_dim"]
    dt = cfg.get("dtype", jnp.bfloat16)

    # embeddings (gathers stay in XLA glue; LayerNorm is a Pallas kernel)
    pos_ids = jnp.arange(S)
    emb = (params["word_emb"][input_ids]
           + params["pos_emb"][pos_ids][None, :, :]
           + params["type_emb"][token_type_ids]).astype(F32)
    h = layernorm(emb.reshape(B * S, H),
                  params["emb_ln_g"], params["emb_ln_b"], out_dtype=dt)

    add_mask = ((1.0 - attention_mask.astype(F32)) * -10000.0).reshape(B, 1, S)
    scale = 1.0 / math.sqrt(d)

    for lp in params["layers"]:
        # fused QKV projection: a single [H, 3H] matmul (weights pre-cast bf16)
        qkv = linear(h, lp["w_qkv"], lp["b_qkv"], out_dtype=dt)      # [B*S, 3H]
        # flash attention reads/writes lane-dense blocks of qkv / ctx directly
        ctx = flash_attention(qkv, add_mask, B, S, nh, d, H, scale, dt)
        # attention output projection fused with bias + residual + LayerNorm
        h = linear_residual_layernorm(ctx, lp["wo"], lp["bo"], h,
                                      lp["ln1_g"], lp["ln1_b"], out_dtype=dt)
        # FFN: intermediate matmul fused with GELU; output fused with add + LN
        inter = linear(h, lp["wi"], lp["bi"], activation="gelu", out_dtype=dt)
        h = linear_residual_layernorm(inter, lp["wo2"], lp["bo2"], h,
                                      lp["ln2_g"], lp["ln2_b"], out_dtype=dt)

    hidden = h.reshape(B, S, H)
    cls = hidden[:, 0, :]                                            # [B, H]
    pooled = linear(cls, params["pool_w"], params["pool_b"],
                    activation="tanh", out_dtype=dt)
    return hidden, pooled


def transformer_model(params, cfg, input_ids, token_type_ids=None,
                      attention_mask=None, labels=None, Smatrix=None):
    B, S = input_ids.shape
    L = cfg["num_labels"]
    dt = cfg.get("dtype", jnp.bfloat16)
    if token_type_ids is None:
        token_type_ids = jnp.zeros((B, S), jnp.int32)
    if attention_mask is None:
        attention_mask = jnp.ones((B, S), F32)

    _, pooled = bert_encoder(params, input_ids, token_type_ids,
                             attention_mask, cfg)

    # dropout: eval-mode semantics -> identity
    # TODO(synk): training-mode dropout (pltpu.prng_*) not implemented here.

    if Smatrix is not None:
        # W_t = self.V(Smatrix); logits = pooled @ W_t^T.
        # Produce W = W_t^T directly (v_w kept in PyTorch [hs, L] layout):
        #   W = v_w @ Smatrix^T + v_b[:, None]
        w_hl = matmul_nt_colbias(params["v_w"], Smatrix.astype(dt),
                                 params["v_b"], out_dtype=dt)        # [H, L]
        logits = linear(pooled, w_hl, jnp.zeros((L,), F32),
                        out_dtype=jnp.float32)
    else:
        logits = linear(pooled, params["w_w"], params["w_b"],
                        out_dtype=jnp.float32)

    if labels is not None:
        return bce_with_logits(logits.reshape(-1, L),
                               labels.reshape(-1, L).astype(F32))
    return logits


# ------------------------------ parameters -----------------------------------

def init_params(key, cfg):
    """Matmul weights are created directly in cfg['dtype'] (no per-forward cast);
    biases / LayerNorm params / embeddings stay f32."""
    H, I, L = cfg["hidden"], cfg["intermediate"], cfg["num_labels"]
    V, P, T = cfg["vocab"], cfg["max_pos"], cfg["type_vocab"]
    dt = cfg.get("dtype", jnp.bfloat16)
    keys = iter(jax.random.split(key, 16 + 8 * cfg["layers"]))

    def w(shape, dtype=dt, scale=0.02):
        return (scale * jax.random.normal(next(keys), shape)).astype(dtype)

    params = {
        "word_emb": w((V, H), F32),
        "pos_emb": w((P, H), F32),
        "type_emb": w((T, H), F32),
        "emb_ln_g": jnp.ones((H,), F32),
        "emb_ln_b": jnp.zeros((H,), F32),
        "pool_w": w((H, H)), "pool_b": jnp.zeros((H,), F32),
        # knowledge head V: Linear(num_labels -> hs), PyTorch layout [hs, L]
        "v_w": w((H, L)), "v_b": jnp.zeros((H,), F32),
        # plain head W: Linear(hs -> num_labels), stored [in, out] = [H, L]
        "w_w": w((H, L)), "w_b": jnp.zeros((L,), F32),
        "layers": [],
    }
    for _ in range(cfg["layers"]):
        params["layers"].append({
            "w_qkv": w((H, 3 * H)), "b_qkv": jnp.zeros((3 * H,), F32),
            "wo": w((H, H)), "bo": jnp.zeros((H,), F32),
            "ln1_g": jnp.ones((H,), F32), "ln1_b": jnp.zeros((H,), F32),
            "wi": w((H, I)), "bi": jnp.zeros((I,), F32),
            "wo2": w((I, H)), "bo2": jnp.zeros((H,), F32),
            "ln2_g": jnp.ones((H,), F32), "ln2_b": jnp.zeros((H,), F32),
        })
    return params


# --------------------------------- main ---------------------------------------

if __name__ == "__main__":
    # head_dim=64 exercises the lane-dense head-pair (2*64 = 128) fast path.
    cfg = dict(vocab=100, max_pos=64, type_vocab=2, hidden=128, heads=2,
               head_dim=64, intermediate=256, layers=2, num_labels=4,
               dtype=jnp.bfloat16)   # bf16 compute, f32 accumulation/stats

    key = jax.random.PRNGKey(0)
    kp, ki, ks, kl = jax.random.split(key, 4)
    params = init_params(kp, cfg)

    B, S, L = 2, 16, cfg["num_labels"]
    input_ids = jax.random.randint(ki, (B, S), 0, cfg["vocab"], dtype=jnp.int32)
    token_type_ids = jnp.zeros((B, S), jnp.int32)
    attention_mask = jnp.ones((B, S), F32)
    Smatrix = jax.random.normal(ks, (L, L), dtype=F32)
    labels = (jax.random.uniform(kl, (B, L)) > 0.5).astype(F32)

    # knowledge path with labels -> scalar BCEWithLogits loss
    loss = transformer_model(params, cfg, input_ids, token_type_ids,
                             attention_mask, labels=labels, Smatrix=Smatrix)
    # knowledge inference path (labels=None) -> logits [B, num_labels]
    logits = transformer_model(params, cfg, input_ids, token_type_ids,
                               attention_mask, labels=None, Smatrix=Smatrix)
    # plain head path (Smatrix=None)
    logits_plain = transformer_model(params, cfg, input_ids, token_type_ids,
                                     attention_mask, labels=None, Smatrix=None)

    jax.block_until_ready((loss, logits, logits_plain))
    assert logits.shape == (B, L) and logits_plain.shape == (B, L)
    assert loss.shape == ()
    print("KERNEL_OK")
</pallas_src>

<mosaic_0001>
module attributes {stable_mosaic.version = 11 : i64} {
  func.func @_layernorm_kernel(%arg0: i32, %arg1: memref<32x128xf32, #tpu.memory_space<vmem>>, %arg2: memref<1x128xf32, #tpu.memory_space<vmem>>, %arg3: memref<1x128xf32, #tpu.memory_space<vmem>>, %arg4: memref<32x128xbf16, #tpu.memory_space<vmem>>) attributes {dimension_semantics = [#tpu.dimension_semantics<parallel>], iteration_bounds = array<i64: 1>, scalar_prefetch = 0 : i64, scratch_operands = 0 : i64, tpu.core_type = #tpu.core_type<tc>, window_params = [{transform_indices = @transform_0, window_bounds = array<i64: 32, 128>}, {pipeline_mode = #tpu.pipeline_mode<synchronous>, transform_indices = @transform_1, window_bounds = array<i64: 1, 128>}, {pipeline_mode = #tpu.pipeline_mode<synchronous>, transform_indices = @transform_2, window_bounds = array<i64: 1, 128>}, {transform_indices = @transform_3, window_bounds = array<i64: 32, 128>}]} {
    %c0 = arith.constant 0 : index
    %c0_0 = arith.constant 0 : index
    %0 = vector.load %arg1[%c0, %c0_0] : memref<32x128xf32, #tpu.memory_space<vmem>>, vector<32x128xf32>
    %cst = arith.constant dense<0.000000e+00> : vector<32xf32>
    %1 = vector.multi_reduction <add>, %0, %cst [1] : vector<32x128xf32> to vector<32xf32>
    %2 = vector.shape_cast %1 : vector<32xf32> to vector<32x1xf32>
    %cst_1 = arith.constant 1.280000e+02 : f32
    %3 = vector.broadcast %cst_1 : f32 to vector<32x1xf32>
    %4 = arith.divf %2, %3 : vector<32x1xf32>
    %5 = vector.broadcast %4 : vector<32x1xf32> to vector<32x128xf32>
    %6 = arith.subf %0, %5 : vector<32x128xf32>
    %7 = vector.broadcast %4 : vector<32x1xf32> to vector<32x128xf32>
    %8 = arith.subf %0, %7 : vector<32x128xf32>
    %9 = arith.mulf %6, %8 : vector<32x128xf32>
    %cst_2 = arith.constant dense<0.000000e+00> : vector<32xf32>
    %10 = vector.multi_reduction <add>, %9, %cst_2 [1] : vector<32x128xf32> to vector<32xf32>
    %11 = vector.shape_cast %10 : vector<32xf32> to vector<32x1xf32>
    %cst_3 = arith.constant 1.280000e+02 : f32
    %12 = vector.broadcast %cst_3 : f32 to vector<32x1xf32>
    %13 = arith.divf %11, %12 : vector<32x1xf32>
    %14 = vector.broadcast %4 : vector<32x1xf32> to vector<32x128xf32>
    %15 = arith.subf %0, %14 : vector<32x128xf32>
    %cst_4 = arith.constant 9.99999996E-13 : f32
    %16 = vector.broadcast %cst_4 : f32 to vector<32x1xf32>
    %17 = arith.addf %13, %16 : vector<32x1xf32>
    %18 = math.rsqrt %17 : vector<32x1xf32>
    %19 = vector.broadcast %18 : vector<32x1xf32> to vector<32x128xf32>
    %20 = arith.mulf %15, %19 : vector<32x128xf32>
    %c0_5 = arith.constant 0 : index
    %c0_6 = arith.constant 0 : index
    %21 = vector.load %arg2[%c0_5, %c0_6] : memref<1x128xf32, #tpu.memory_space<vmem>>, vector<1x128xf32>
    %22 = vector.broadcast %21 : vector<1x128xf32> to vector<32x128xf32>
    %23 = arith.mulf %20, %22 : vector<32x128xf32>
    %c0_7 = arith.constant 0 : index
    %c0_8 = arith.constant 0 : index
    %24 = vector.load %arg3[%c0_7, %c0_8] : memref<1x128xf32, #tpu.memory_space<vmem>>, vector<1x128xf32>
    %25 = vector.broadcast %24 : vector<1x128xf32> to vector<32x128xf32>
    %26 = arith.addf %23, %25 : vector<32x128xf32>
    %27 = arith.truncf %26 : vector<32x128xf32> to vector<32x128xbf16>
    %c0_9 = arith.constant 0 : index
    %c0_10 = arith.constant 0 : index
    %28 = vector.load %arg4[%c0_9, %c0_10] : memref<32x128xbf16, #tpu.memory_space<vmem>>, vector<32x128xbf16>
    tpu.vector_store %arg4[%c0_9, %c0_10], %27 {strides = array<i32>} : memref<32x128xbf16, #tpu.memory_space<vmem>>, vector<32x128xbf16>,
    return
  }
  func.func @transform_0(%arg0: i32) -> (i32, i32) {
    %c0_i32 = arith.constant 0 : i32
    %c0_i32_0 = arith.constant 0 : i32
    return %arg0, %c0_i32 : i32, i32
  }
  func.func @transform_1(%arg0: i32) -> (i32, i32) {
    %c0_i32 = arith.constant 0 : i32
    %c0_i32_0 = arith.constant 0 : i32
    %c0_i32_1 = arith.constant 0 : i32
    return %c0_i32, %c0_i32_0 : i32, i32
  }
  func.func @transform_2(%arg0: i32) -> (i32, i32) {
    %c0_i32 = arith.constant 0 : i32
    %c0_i32_0 = arith.constant 0 : i32
    %c0_i32_1 = arith.constant 0 : i32
    return %c0_i32, %c0_i32_0 : i32, i32
  }
  func.func @transform_3(%arg0: i32) -> (i32, i32) {
    %c0_i32 = arith.constant 0 : i32
    %c0_i32_0 = arith.constant 0 : i32
    return %arg0, %c0_i32 : i32, i32
  }
}

</mosaic_0001>

<llo_original>
// kernel: tpu_custom_call.1
$region0: #{tpu_custom_call.1}
  #allocation0 [shape = 'u32[]', space=smem, size = 0x4, offset = 0x4, fixed_abs, tag = 'smem constant byte address 0x4 - core index']
  #allocation1 [shape = 'u32[144,128]{1,0:T(1,128)}', space=vmem, size = 0x12000, scoped, tag = 'internal scratch']
  %s0 = inlined_call_operand.hbm [shape: f32[32,128], index: 0, kind: input, shape index: {}]
  %s1 = inlined_call_operand.vmem [shape: f32[1,128], index: 1, kind: input, shape index: {}]
  %s2 = inlined_call_operand.vmem [shape: f32[1,128], index: 2, kind: input, shape index: {}]
  %s3 = inlined_call_operand.hbm [shape: bf16[32,128], index: 3, kind: output, shape index: {}]
  %s4 = sld [smem:[#allocation0]]
  $region26: #{tpu_custom_call.1} parent=0
    _
  %s6 = ssub.s32 1, %s4
  %s7 = scalar_select 0, %s6, %s4
  $region1: #{tpu_custom_call.1} parent=0
    #allocation2 [shape = 'u8[16384]{0}', space=vmem, size = 0x4000, scoped, tag = 'input window, operand 0, single buffered']
    #allocation3 [shape = 's32[1]{0}', space=sflag, size = 0x4, scoped, tag = 'scoped memory for tpu_custom_call.1']
    #allocation4 [shape = 's32[1]{0}', space=sflag, size = 0x4, scoped, tag = 'scoped memory for tpu_custom_call.1']
    #allocation5 [shape = 'u8[8192]{0}', space=vmem, size = 0x2000, scoped, tag = 'output window, operand 0, single buffered']
    %8 = vsyncpa [#allocation3], 0
    %9 = vsyncpa [#allocation4], 0
    // Predicated region
    $region2: #{tpu_custom_call.1} parent=1 // pred_check
      _
    $region3: #{tpu_custom_call.1} parent=1 // pred_check_branch
      %11 = sbr.rel (0) target = $region5
    $region4: #{tpu_custom_call.1} parent=1 // pred_region
      %s13 = ssub.s32 512, 512
      %14 = vsyncadd [#allocation3], %s13
      %s15 = sshll.u32 [#allocation2], 4
      %s16 = int_to_ptr.vmem [resolvable:$true] %s15
      %21 = dma.hbm_to_vmem [thread:$0]  %s0, 512, %s16, [#allocation3], 128, 128, 8
    $region5: #{tpu_custom_call.1} parent=1 // pred_fallthru
      _
    // Predicated region
    $region6: #{tpu_custom_call.1} parent=1 // pred_check
      _
    $region7: #{tpu_custom_call.1} parent=1 // pred_check_branch
      %23 = sbr.rel (0) target = $region9
    $region8: #{tpu_custom_call.1} parent=1 // pred_region
      _
    $region9: #{tpu_custom_call.1} parent=1 // pred_fallthru
      _
    // Predicated region
    $region10: #{tpu_custom_call.1} parent=1 // pred_check
      _
    $region11: #{tpu_custom_call.1} parent=1 // pred_check_branch
      %25 = sbr.rel (0) target = $region13
    $region12: #{tpu_custom_call.1} parent=1 // pred_region
      _
    $region13: #{tpu_custom_call.1} parent=1 // pred_fallthru
      _
    // Predicated region
    $region14: #{tpu_custom_call.1} parent=1 // pred_check
      _
    $region15: #{tpu_custom_call.1} parent=1 // pred_check_branch
      %27 = sbr.rel (0) target = $region17
    $region16: #{tpu_custom_call.1} parent=1 // pred_region
      %28 = dma.done [#allocation3], 512
    $region17: #{tpu_custom_call.1} parent=1 // pred_fallthru
      _
    %v29 = vld [vmem:[#allocation2] sm:$0xff]
    %v30 = vld [vmem:[#allocation2 + $0x8] sm:$0xff]
    %v31 = vld [vmem:[#allocation2 + $0x10] sm:$0xff]
    %v32 = vld [vmem:[#allocation2 + $0x18] sm:$0xff]
    %33 = vadd.xlane.f32.xlu0 %v29
    %v34 = vpop.xlane.xlu0 %33
    %35 = vadd.xlane.f32.xlu0 %v30
    %v36 = vpop.xlane.xlu0 %35
    %37 = vadd.xlane.f32.xlu0 %v31
    %v38 = vpop.xlane.xlu0 %37
    %39 = vadd.xlane.f32.xlu0 %v32
    %v40 = vpop.xlane.xlu0 %39
    %v41 = vrcp.pop 128.0
    %v42 = vmul.f32 %v34, %v41
    %v43 = vmul.f32 %v36, %v41
    %v44 = vmul.f32 %v38, %v41
    %v45 = vmul.f32 %v40, %v41
    %v46 = vsub.f32 %v29, %v42
    %v47 = vsub.f32 %v30, %v43
    %v48 = vsub.f32 %v31, %v44
    %v49 = vsub.f32 %v32, %v45
    %v50 = vmul.f32 %v46, %v46
    %v51 = vmul.f32 %v47, %v47
    %v52 = vmul.f32 %v48, %v48
    %v53 = vmul.f32 %v49, %v49
    %54 = vadd.xlane.f32.xlu0 %v50
    %v55 = vpop.xlane.xlu0 %54
    %56 = vadd.xlane.f32.xlu0 %v51
    %v57 = vpop.xlane.xlu0 %56
    %58 = vadd.xlane.f32.xlu0 %v52
    %v59 = vpop.xlane.xlu0 %58
    %60 = vadd.xlane.f32.xlu0 %v53
    %v61 = vpop.xlane.xlu0 %60
    %v62 = vmul.f32 %v55, %v41
    %v63 = vmul.f32 %v57, %v41
    %v64 = vmul.f32 %v59, %v41
    %v65 = vmul.f32 %v61, %v41
    %v66 = vadd.f32 %v62, 1e-12
    %v67 = vadd.f32 %v63, 1e-12
    %v68 = vadd.f32 %v64, 1e-12
    %v69 = vadd.f32 %v65, 1e-12
    %v70 = vrsqrt.pop %v66
    %v71 = vrsqrt.pop %v67
    %v72 = vrsqrt.pop %v68
    %v73 = vrsqrt.pop %v69
    %v74 = vmul.f32 %v46, %v70
    %v75 = vmul.f32 %v47, %v71
    %v76 = vmul.f32 %v48, %v72
    %v77 = vmul.f32 %v49, %v73
    %v78 = vld [vmem:[%s1] sm:$0x1]
    %v80 = vlaneseq
    %v81 = vshrl.u32 %v80, 7
    %v82 = vsub.s32 0, %v81
    %v83 = vrot.slane %v78, %v82
    %v85 = vmul.f32 %v74, %v83
    %v86 = vmul.f32 %v75, %v83
    %v87 = vmul.f32 %v76, %v83
    %v88 = vmul.f32 %v77, %v83
    %v89 = vld [vmem:[%s2] sm:$0x1]
    %v91 = vlaneseq
    %v92 = vshrl.u32 %v91, 7
    %v93 = vsub.s32 0, %v92
    %v94 = vrot.slane %v89, %v93
    %v96 = vadd.f32 %v85, %v94
    %v97 = vadd.f32 %v86, %v94
    %v98 = vadd.f32 %v87, %v94
    %v99 = vadd.f32 %v88, %v94
    %v100 = vpack.c.bf16 %v97, %v96
    %v101 = vpack.c.bf16 %v99, %v98
    %v104 = vunpack.c.l.b16 %v100
    %v105 = vunpack.c.h.b16 %v100
    %v106 = vunpack.c.l.b16 %v101
    %v107 = vunpack.c.h.b16 %v101
    %v108 = vpack.c.b16 %v104, %v104
    %v109 = vpack.c.b16 %v105, %v105
    %v110 = vpack.c.b16 %v106, %v106
    %v111 = vpack.c.b16 %v107, %v107
    %116 = vst [vmem:[#allocation5] sm:$0xf] %v108
    %117 = vst [vmem:[#allocation5 + $0x4] sm:$0xf] %v109
    %118 = vst [vmem:[#allocation5 + $0x8] sm:$0xf] %v110
    %119 = vst [vmem:[#allocation5 + $0xc] sm:$0xf] %v111
    // Predicated region
    $region18: #{tpu_custom_call.1} parent=1 // pred_check
      _
    $region19: #{tpu_custom_call.1} parent=1 // pred_check_branch
      %121 = sbr.rel (0) target = $region21
    $region20: #{tpu_custom_call.1} parent=1 // pred_region
      %s123 = ssub.s32 256, 256
      %124 = vsyncadd [#allocation4], %s123
      %s125 = sshll.u32 [#allocation5], 4
      %s126 = int_to_ptr.vmem [resolvable:$true] %s125
      %131 = dma.vmem_to_hbm [thread:$0]  %s126, 256, %s3, [#allocation4], 64, 64, 4
    $region21: #{tpu_custom_call.1} parent=1 // pred_fallthru
      _
    // Predicated region
    $region22: #{tpu_custom_call.1} parent=1 // pred_check
      _
    $region23: #{tpu_custom_call.1} parent=1 // pred_check_branch
      %133 = sbr.rel (0) target = $region25
    $region24: #{tpu_custom_call.1} parent=1 // pred_region
      %134 = dma.done [#allocation4], 256
    $region25: #{tpu_custom_call.1} parent=1 // pred_fallthru
      _
    %135 = vsyncpa [#allocation3], 1
    %136 = vsyncpa [#allocation4], 1

</llo_original>
